<compile_context>
chip_gen: v6e
topology: v6e:2x2x1
jax: 0.10.0
libtpu: 0.0.40
codegen_flags: <defaults>
</compile_context>

<pallas_src>
import functools
import math

import jax
import jax.numpy as jnp
from jax.experimental import pallas as pl
from jax.experimental.pallas import tpu as pltpu

DROPOUT_P = 0.2  # TODO(synk): training-mode dropout on the attention probabilities is not
                 # applied (eval-mode identity); it would need pltpu.prng_seed +
                 # pltpu.prng_random_bits masking in-kernel.


def _head_kernel(x_ref, wq_ref, wk_ref, wv_ref, o_ref, *, scale):
    # x_ref:  (1, T, C)   f32
    # w*_ref: (C, HSP)    bf16  (nn.Linear weight pre-transposed to (in, out), zero-padded cols)
    # o_ref:  (1, T, HSP) f32
    x = x_ref[0].astype(jnp.bfloat16)                                   # (T, C)

    q = jnp.dot(x, wq_ref[...], preferred_element_type=jnp.float32)     # (T, HSP) f32
    k = jnp.dot(x, wk_ref[...], preferred_element_type=jnp.float32)     # (T, HSP) f32
    v = jnp.dot(x, wv_ref[...], preferred_element_type=jnp.float32)     # (T, HSP) f32

    # scaled attention scores (T, T): bf16 operands, f32 MXU accumulation
    s = jnp.einsum('qd,kd->qk', q.astype(jnp.bfloat16), k.astype(jnp.bfloat16),
                   preferred_element_type=jnp.float32) * scale

    # causal (tril) mask: keep col <= row
    T = s.shape[0]
    row = jax.lax.broadcasted_iota(jnp.int32, (T, T), 0)
    col = jax.lax.broadcasted_iota(jnp.int32, (T, T), 1)
    s = jnp.where(col <= row, s, -jnp.inf)

    # row-wise softmax in f32 (diagonal is always unmasked, so the sum is >= 1)
    m = jnp.max(s, axis=-1, keepdims=True)
    p = jnp.exp(s - m)
    p = p / jnp.sum(p, axis=-1, keepdims=True)

    # weighted sum of values (T, HSP)
    out = jnp.dot(p.astype(jnp.bfloat16), v.astype(jnp.bfloat16),
                  preferred_element_type=jnp.float32)
    o_ref[0] = out.astype(o_ref.dtype)


def head_attention(x, wq, wk, wv):
    """Single-head causal self-attention (eval-mode dropout = identity).

    x:  (B, T, C) float32, T <= block
    w*: (C, headSize) float32  -- i.e. nn.Linear(embed, headSize, bias=False).weight.T
    returns (B, T, headSize) float32
    """
    B, T, C = x.shape
    hs = wq.shape[1]
    scale = float(hs) ** -0.5            # matches k.shape[-1] ** -0.5 in the module

    # Zero-pad head dim to a lane-dense multiple of 128 (padded columns of q/k/v
    # are exactly zero => scores and outputs are unchanged; sliced off below).
    hsp = ((hs + 127) // 128) * 128

    def prep(w):
        w = w.astype(jnp.bfloat16)
        if hsp != hs:
            w = jnp.pad(w, ((0, 0), (0, hsp - hs)))
        return w

    wq_p, wk_p, wv_p = prep(wq), prep(wk), prep(wv)
    kernel = functools.partial(_head_kernel, scale=scale)

    out = pl.pallas_call(
        kernel,
        out_shape=jax.ShapeDtypeStruct((B, T, hsp), x.dtype),
        grid_spec=pltpu.PrefetchScalarGridSpec(
            num_scalar_prefetch=0,
            grid=(B,),
            in_specs=[
                pl.BlockSpec((1, T, C), lambda b: (b, 0, 0)),    # x, one batch element
                pl.BlockSpec((C, hsp), lambda b: (0, 0)),        # Wq (resident)
                pl.BlockSpec((C, hsp), lambda b: (0, 0)),        # Wk (resident)
                pl.BlockSpec((C, hsp), lambda b: (0, 0)),        # Wv (resident)
            ],
            out_specs=pl.BlockSpec((1, T, hsp), lambda b: (b, 0, 0)),
        ),
        compiler_params=pltpu.CompilerParams(
            dimension_semantics=("parallel",)),
    )(x, wq_p, wk_p, wv_p)

    return out[..., :hs]


def _reference(x, wq, wk, wv, *, matmul_dtype=jnp.float32):
    """Pure-JAX reference. matmul_dtype=bf16 mirrors the kernel's MXU precision."""
    hs = wq.shape[1]
    cast = lambda a: a.astype(matmul_dtype)
    q = jnp.einsum('btc,ch->bth', cast(x), cast(wq), preferred_element_type=jnp.float32)
    k = jnp.einsum('btc,ch->bth', cast(x), cast(wk), preferred_element_type=jnp.float32)
    v = jnp.einsum('btc,ch->bth', cast(x), cast(wv), preferred_element_type=jnp.float32)
    s = jnp.einsum('bqh,bkh->bqk', cast(q), cast(k),
                   preferred_element_type=jnp.float32) * float(hs) ** -0.5
    T = x.shape[1]
    mask = jnp.tril(jnp.ones((T, T), dtype=bool))
    s = jnp.where(mask, s, -jnp.inf)
    p = jax.nn.softmax(s, axis=-1)
    out = jnp.einsum('bqk,bkh->bqh', cast(p), cast(v), preferred_element_type=jnp.float32)
    return out.astype(x.dtype)


if __name__ == "__main__":
    key = jax.random.PRNGKey(0)
    kx, kq, kk, kv = jax.random.split(key, 4)

    # Small shapes consistent with the module: embed=384, headSize=64, T <= block=256.
    B, T, C, HS = 2, 16, 384, 64
    x = jax.random.normal(kx, (B, T, C), jnp.float32)

    bound = 1.0 / math.sqrt(C)   # PyTorch nn.Linear default init; stored as (in, out) = W.T
    wq = jax.random.uniform(kq, (C, HS), jnp.float32, -bound, bound)
    wk = jax.random.uniform(kk, (C, HS), jnp.float32, -bound, bound)
    wv = jax.random.uniform(kv, (C, HS), jnp.float32, -bound, bound)

    out = head_attention(x, wq, wk, wv)
    out = jax.block_until_ready(out)
    assert out.shape == (B, T, HS)

    # Tight check against a reference that uses the same bf16-matmul / f32-accumulate path.
    ref_bf16 = _reference(x, wq, wk, wv, matmul_dtype=jnp.bfloat16)
    assert jnp.allclose(out, ref_bf16, atol=2e-3, rtol=2e-3), "mismatch vs bf16-matmul reference"

    # Loose sanity bound against the fully-f32 (PyTorch-faithful) reference.
    ref_f32 = _reference(x, wq, wk, wv, matmul_dtype=jnp.float32)
    assert float(jnp.max(jnp.abs(out - ref_f32))) < 0.1, "bf16 drift too large vs f32 reference"

    print("KERNEL_OK")
</pallas_src>

<mosaic_0001>
module attributes {stable_mosaic.version = 11 : i64} {
  func.func @_head_kernel(%arg0: i32, %arg1: memref<1x16x384xf32, #tpu.memory_space<vmem>>, %arg2: memref<384x128xbf16, #tpu.memory_space<vmem>>, %arg3: memref<384x128xbf16, #tpu.memory_space<vmem>>, %arg4: memref<384x128xbf16, #tpu.memory_space<vmem>>, %arg5: memref<1x16x128xf32, #tpu.memory_space<vmem>>) attributes {dimension_semantics = [#tpu.dimension_semantics<parallel>], iteration_bounds = array<i64: 2>, scalar_prefetch = 0 : i64, scratch_operands = 0 : i64, tpu.core_type = #tpu.core_type<tc>, window_params = [{transform_indices = @transform_0, window_bounds = array<i64: 1, 16, 384>}, {pipeline_mode = #tpu.pipeline_mode<synchronous>, transform_indices = @transform_1, window_bounds = array<i64: 384, 128>}, {pipeline_mode = #tpu.pipeline_mode<synchronous>, transform_indices = @transform_2, window_bounds = array<i64: 384, 128>}, {pipeline_mode = #tpu.pipeline_mode<synchronous>, transform_indices = @transform_3, window_bounds = array<i64: 384, 128>}, {transform_indices = @transform_4, window_bounds = array<i64: 1, 16, 128>}]} {
    %c0 = arith.constant 0 : index
    %c0_0 = arith.constant 0 : index
    %c0_1 = arith.constant 0 : index
    %0 = vector.load %arg1[%c0, %c0_0, %c0_1] : memref<1x16x384xf32, #tpu.memory_space<vmem>>, vector<1x16x384xf32>
    %1 = vector.shape_cast %0 : vector<1x16x384xf32> to vector<16x384xf32>
    %2 = arith.truncf %1 : vector<16x384xf32> to vector<16x384xbf16>
    %c0_2 = arith.constant 0 : index
    %c0_3 = arith.constant 0 : index
    %3 = vector.load %arg2[%c0_2, %c0_3] : memref<384x128xbf16, #tpu.memory_space<vmem>>, vector<384x128xbf16>
    %cst = arith.constant dense<0.000000e+00> : vector<16x128xf32>
    %4 = tpu.matmul %2, %3, %cst {dimension_numbers = #tpu.dot_dimension_numbers<[1], [0], [0], [1], [0, 0, 1, 1], [], []>} : vector<16x384xbf16>, vector<384x128xbf16>, vector<16x128xf32> -> vector<16x128xf32>
    %c0_4 = arith.constant 0 : index
    %c0_5 = arith.constant 0 : index
    %5 = vector.load %arg3[%c0_4, %c0_5] : memref<384x128xbf16, #tpu.memory_space<vmem>>, vector<384x128xbf16>
    %cst_6 = arith.constant dense<0.000000e+00> : vector<16x128xf32>
    %6 = tpu.matmul %2, %5, %cst_6 {dimension_numbers = #tpu.dot_dimension_numbers<[1], [0], [0], [1], [0, 0, 1, 1], [], []>} : vector<16x384xbf16>, vector<384x128xbf16>, vector<16x128xf32> -> vector<16x128xf32>
    %c0_7 = arith.constant 0 : index
    %c0_8 = arith.constant 0 : index
    %7 = vector.load %arg4[%c0_7, %c0_8] : memref<384x128xbf16, #tpu.memory_space<vmem>>, vector<384x128xbf16>
    %cst_9 = arith.constant dense<0.000000e+00> : vector<16x128xf32>
    %8 = tpu.matmul %2, %7, %cst_9 {dimension_numbers = #tpu.dot_dimension_numbers<[1], [0], [0], [1], [0, 0, 1, 1], [], []>} : vector<16x384xbf16>, vector<384x128xbf16>, vector<16x128xf32> -> vector<16x128xf32>
    %9 = arith.truncf %4 : vector<16x128xf32> to vector<16x128xbf16>
    %10 = arith.truncf %6 : vector<16x128xf32> to vector<16x128xbf16>
    "tpu.trace_start"() <{level = 10 : i32, message = "qd,kd->qk"}> : () -> ()
    %cst_10 = arith.constant dense<0.000000e+00> : vector<16x16xf32>
    %11 = tpu.matmul %9, %10, %cst_10 {dimension_numbers = #tpu.dot_dimension_numbers<[1], [1], [0], [0], [0, 0, 1, 0], [], []>} : vector<16x128xbf16>, vector<16x128xbf16>, vector<16x16xf32> -> vector<16x16xf32>
    "tpu.trace_stop"() : () -> ()
    %cst_11 = arith.constant 1.250000e-01 : f32
    %12 = vector.broadcast %cst_11 : f32 to vector<16x16xf32>
    %13 = arith.mulf %11, %12 : vector<16x16xf32>
    %14 = tpu.iota {dimensions = array<i32: 0>} : vector<16x16xi32>
    %15 = tpu.iota {dimensions = array<i32: 1>} : vector<16x16xi32>
    %16 = arith.cmpi sle, %15, %14 : vector<16x16xi32>
    %cst_12 = arith.constant 0xFF800000 : f32
    %17 = vector.broadcast %cst_12 : f32 to vector<16x16xf32>
    %18 = arith.select %16, %13, %17 : vector<16x16xi1>, vector<16x16xf32>
    %cst_13 = arith.constant dense<0xFF800000> : vector<16xf32>
    %19 = vector.multi_reduction <maximumf>, %18, %cst_13 [1] : vector<16x16xf32> to vector<16xf32>
    %20 = vector.shape_cast %19 : vector<16xf32> to vector<16x1xf32>
    %21 = vector.broadcast %20 : vector<16x1xf32> to vector<16x16xf32>
    %22 = arith.subf %18, %21 : vector<16x16xf32>
    %23 = math.exp %22 : vector<16x16xf32>
    %cst_14 = arith.constant dense<0.000000e+00> : vector<16xf32>
    %24 = vector.multi_reduction <add>, %23, %cst_14 [1] : vector<16x16xf32> to vector<16xf32>
    %25 = vector.shape_cast %24 : vector<16xf32> to vector<16x1xf32>
    %26 = vector.broadcast %25 : vector<16x1xf32> to vector<16x16xf32>
    %27 = arith.divf %23, %26 : vector<16x16xf32>
    %28 = arith.truncf %27 : vector<16x16xf32> to vector<16x16xbf16>
    %29 = arith.truncf %8 : vector<16x128xf32> to vector<16x128xbf16>
    %cst_15 = arith.constant dense<0.000000e+00> : vector<16x128xf32>
    %30 = tpu.matmul %28, %29, %cst_15 {dimension_numbers = #tpu.dot_dimension_numbers<[1], [0], [0], [1], [0, 0, 1, 1], [], []>} : vector<16x16xbf16>, vector<16x128xbf16>, vector<16x128xf32> -> vector<16x128xf32>
    %c0_16 = arith.constant 0 : index
    %c0_17 = arith.constant 0 : index
    %c0_18 = arith.constant 0 : index
    %31 = vector.load %arg5[%c0_16, %c0_17, %c0_18] : memref<1x16x128xf32, #tpu.memory_space<vmem>>, vector<1x16x128xf32>
    %32 = vector.shape_cast %31 : vector<1x16x128xf32> to vector<16x128xf32>
    %33 = vector.shape_cast %30 : vector<16x128xf32> to vector<1x16x128xf32>
    tpu.vector_store %arg5[%c0_16, %c0_17, %c0_18], %33 {strides = array<i32>} : memref<1x16x128xf32, #tpu.memory_space<vmem>>, vector<1x16x128xf32>,
    return
  }
  func.func @transform_0(%arg0: i32) -> (i32, i32, i32) {
    %c0_i32 = arith.constant 0 : i32
    %c0_i32_0 = arith.constant 0 : i32
    %c0_i32_1 = arith.constant 0 : i32
    return %arg0, %c0_i32, %c0_i32_0 : i32, i32, i32
  }
  func.func @transform_1(%arg0: i32) -> (i32, i32) {
    %c0_i32 = arith.constant 0 : i32
    %c0_i32_0 = arith.constant 0 : i32
    %c0_i32_1 = arith.constant 0 : i32
    return %c0_i32, %c0_i32_0 : i32, i32
  }
  func.func @transform_2(%arg0: i32) -> (i32, i32) {
    %c0_i32 = arith.constant 0 : i32
    %c0_i32_0 = arith.constant 0 : i32
    %c0_i32_1 = arith.constant 0 : i32
    return %c0_i32, %c0_i32_0 : i32, i32
  }
  func.func @transform_3(%arg0: i32) -> (i32, i32) {
    %c0_i32 = arith.constant 0 : i32
    %c0_i32_0 = arith.constant 0 : i32
    %c0_i32_1 = arith.constant 0 : i32
    return %c0_i32, %c0_i32_0 : i32, i32
  }
  func.func @transform_4(%arg0: i32) -> (i32, i32, i32) {
    %c0_i32 = arith.constant 0 : i32
    %c0_i32_0 = arith.constant 0 : i32
    %c0_i32_1 = arith.constant 0 : i32
    return %arg0, %c0_i32, %c0_i32_0 : i32, i32, i32
  }
}

</mosaic_0001>

<llo_original>
// kernel: tpu_custom_call.1
$region0: #{tpu_custom_call.1}
  #allocation0 [shape = 'u32[]', space=smem, size = 0x4, offset = 0x4, fixed_abs, tag = 'smem constant byte address 0x4 - core index']
  #allocation1 [shape = 'u32[144,128]{1,0:T(1,128)}', space=vmem, size = 0x12000, scoped, tag = 'internal scratch']
  %s0 = inlined_call_operand.hbm [shape: f32[2,16,384], index: 0, kind: input, shape index: {}]
  %s1 = inlined_call_operand.hbm [shape: bf16[384,128], index: 1, kind: input, shape index: {}]
  %s2 = inlined_call_operand.hbm [shape: bf16[384,128], index: 2, kind: input, shape index: {}]
  %s3 = inlined_call_operand.hbm [shape: bf16[384,128], index: 3, kind: input, shape index: {}]
  %s4 = inlined_call_operand.hbm [shape: f32[2,16,128], index: 4, kind: output, shape index: {}]
  %s5 = sld [smem:[#allocation0]]
  $region65: #{tpu_custom_call.1} parent=0
    _
  %s7 = ssub.s32 1, %s5
  %s8 = scalar_select 0, %s7, %s5
  $region1: #{tpu_custom_call.1} parent=0
    #allocation2 [shape = 'u8[49152]{0}', space=vmem, size = 0xc000, scoped, tag = 'input window, operand 0']
    #allocation3 [shape = 's32[2]{0}', space=sflag, size = 0x8, scoped, tag = 'scoped memory for tpu_custom_call.1']
    #allocation4 [shape = 's32[2]{0}', space=sflag, size = 0x8, scoped, tag = 'scoped memory for tpu_custom_call.1']
    #allocation5 [shape = 'u8[98304]{0}', space=vmem, size = 0x18000, scoped, tag = 'input window, operand 1, single buffered']
    #allocation6 [shape = 's32[1]{0}', space=sflag, size = 0x4, scoped, tag = 'scoped memory for tpu_custom_call.1']
    #allocation7 [shape = 'u8[98304]{0}', space=vmem, size = 0x18000, scoped, tag = 'input window, operand 2, single buffered']
    #allocation8 [shape = 'u8[98304]{0}', space=vmem, size = 0x18000, scoped, tag = 'input window, operand 3, single buffered']
    #allocation9 [shape = 's32[1]{0}', space=sflag, size = 0x4, scoped, tag = 'scoped memory for tpu_custom_call.1']
    #allocation10 [shape = 'u8[16384]{0}', space=vmem, size = 0x4000, scoped, tag = 'output window, operand 0']
    %9 = vsyncpa [#allocation3], 0
    %s10 = scalar_lea.sflag [#allocation3], 1
    %11 = vsyncpa %s10, 0
    %12 = vsyncpa [#allocation6], 0
    %13 = vsyncpa [#allocation9], 0
    %14 = vsyncpa [#allocation4], 0
    %s15 = scalar_lea.sflag [#allocation4], 1
    %16 = vsyncpa %s15, 0
    loop: start=0, step=1, limit=4
    $region2: #{tpu_custom_call.1} parent=1 // loop_pre_header
      _
    $region3: #{tpu_custom_call.1} parent=1 // loop_header
      %s18 = sphi 0, %s22
      %p19 = scmp.ge.s32.totalorder %s18, 4
      %s28 = sphi 0, %s30
      %s31 = sphi 0, %s28
      %s32 = sphi 0, %s31
      %s48 = sphi 0, %s32
      %s52 = sphi 0, %s52
      %s54 = sphi 0, %s52
      %s55 = sphi 0, %s54
      %s69 = sphi 0, %s55
      %s73 = sphi 0, %s73
      %s75 = sphi 0, %s73
      %s76 = sphi 0, %s75
      %s90 = sphi 0, %s76
      %s94 = sphi 0, %s94
      %s96 = sphi 0, %s94
      %s97 = sphi 0, %s96
      %s111 = sphi 0, %s97
      %s117 = sphi 0, %s119
      %s120 = sphi 0, %s117
      %s121 = sphi 0, %s120
      %s137 = sphi 0, %s121
    $region4: #{tpu_custom_call.1} parent=1 // loop_header_branch
      %21 = sbr.rel (%p19) target = $region8
    $region5: #{tpu_custom_call.1} parent=1 // loop_body
      %s23 = ssub.s32 %s18, 1
      %s24 = ssub.s32 %s18, 2
      %s25 = sadd.s32 %s18, 1
      %s26 = ssub.s32 %s18, %s25
      %p27 = scmp.eq.s32.totalorder %s26, 0
      %s29 = sadd.s32 %s28, 1
      %s30 = scalar_select %p27, %s28, %s29
      %p33 = pneg %p27
      %p34 = scmp.eq.s32.totalorder %s18, 1
      %p35 = por %p33, %p34
      %p36 = scmp.ne.s32.totalorder %s28, %s31
      %p37 = scmp.eq.s32.totalorder %s18, 0
      %p38 = por %p36, %p37
      %p39 = scmp.ne.s32.totalorder %s28, %s31
      %p40 = scmp.eq.s32.totalorder %s23, 1
      %p41 = por %p39, %p40
      %p42 = scmp.ne.s32.totalorder %s31, %s32
      %p43 = scmp.eq.s32.totalorder %s23, 0
      %p44 = por %p42, %p43
      %p45 = scmp.ne.s32.totalorder %s31, %s32
      %p46 = scmp.eq.s32.totalorder %s24, 1
      %p47 = por %p45, %p46
      %p49 = scmp.ne.s32.totalorder %s32, %s48
      %p50 = scmp.eq.s32.totalorder %s24, 0
      %p51 = por %p49, %p50
      %s53 = sadd.s32 %s52, 1
      %p56 = scmp.eq.s32.totalorder %s18, 1
      %p57 = scmp.ne.s32.totalorder %s52, %s54
      %p58 = scmp.eq.s32.totalorder %s18, 0
      %p59 = por %p57, %p58
      %p60 = scmp.ne.s32.totalorder %s52, %s54
      %p61 = scmp.eq.s32.totalorder %s23, 1
      %p62 = por %p60, %p61
      %p63 = scmp.ne.s32.totalorder %s54, %s55
      %p64 = scmp.eq.s32.totalorder %s23, 0
      %p65 = por %p63, %p64
      %p66 = scmp.ne.s32.totalorder %s54, %s55
      %p67 = scmp.eq.s32.totalorder %s24, 1
      %p68 = por %p66, %p67
      %p70 = scmp.ne.s32.totalorder %s55, %s69
      %p71 = scmp.eq.s32.totalorder %s24, 0
      %p72 = por %p70, %p71
      %s74 = sadd.s32 %s73, 1
      %p77 = scmp.eq.s32.totalorder %s18, 1
      %p78 = scmp.ne.s32.totalorder %s73, %s75
      %p79 = scmp.eq.s32.totalorder %s18, 0
      %p80 = por %p78, %p79
      %p81 = scmp.ne.s32.totalorder %s73, %s75
      %p82 = scmp.eq.s32.totalorder %s23, 1
      %p83 = por %p81, %p82
      %p84 = scmp.ne.s32.totalorder %s75, %s76
      %p85 = scmp.eq.s32.totalorder %s23, 0
      %p86 = por %p84, %p85
      %p87 = scmp.ne.s32.totalorder %s75, %s76
      %p88 = scmp.eq.s32.totalorder %s24, 1
      %p89 = por %p87, %p88
      %p91 = scmp.ne.s32.totalorder %s76, %s90
      %p92 = scmp.eq.s32.totalorder %s24, 0
      %p93 = por %p91, %p92
      %s95 = sadd.s32 %s94, 1
      %p98 = scmp.eq.s32.totalorder %s18, 1
      %p99 = scmp.ne.s32.totalorder %s94, %s96
      %p100 = scmp.eq.s32.totalorder %s18, 0
      %p101 = por %p99, %p100
      %p102 = scmp.ne.s32.totalorder %s94, %s96
      %p103 = scmp.eq.s32.totalorder %s23, 1
      %p104 = por %p102, %p103
      %p105 = scmp.ne.s32.totalorder %s96, %s97
      %p106 = scmp.eq.s32.totalorder %s23, 0
      %p107 = por %p105, %p106
      %p108 = scmp.ne.s32.totalorder %s96, %s97
      %p109 = scmp.eq.s32.totalorder %s24, 1
      %p110 = por %p108, %p109
      %p112 = scmp.ne.s32.totalorder %s97, %s111
      %p113 = scmp.eq.s32.totalorder %s24, 0
      %p114 = por %p112, %p113
      %s115 = ssub.s32 %s18, %s25
      %p116 = scmp.eq.s32.totalorder %s115, 0
      %s118 = sadd.s32 %s117, 1
      %s119 = scalar_select %p116, %s117, %s118
      %p122 = pneg %p116
      %p123 = scmp.eq.s32.totalorder %s18, 1
      %p124 = por %p122, %p123
      %p125 = scmp.ne.s32.totalorder %s117, %s120
      %p126 = scmp.eq.s32.totalorder %s18, 0
      %p127 = por %p125, %p126
      %p128 = scmp.ne.s32.totalorder %s117, %s120
      %p129 = scmp.eq.s32.totalorder %s23, 1
      %p130 = por %p128, %p129
      %p131 = scmp.ne.s32.totalorder %s120, %s121
      %p132 = scmp.eq.s32.totalorder %s23, 0
      %p133 = por %p131, %p132
      %p134 = scmp.ne.s32.totalorder %s120, %s121
      %p135 = scmp.eq.s32.totalorder %s24, 1
      %p136 = por %p134, %p135
      %p138 = scmp.ne.s32.totalorder %s121, %s137
      %p139 = scmp.eq.s32.totalorder %s24, 0
      %p140 = por %p138, %p139
      %p141 = scmp.le.s32.totalorder 1, %s18
      %p142 = scmp.lt.s32.totalorder %s18, 3
      %p143 = pnand %p141, %p142
      %p144 = pneg %p143
      // Predicated region
      $region9: #{tpu_custom_call.1} parent=5 // pred_check
        _
      $region10: #{tpu_custom_call.1} parent=5 // pred_check_branch
        %146 = sbr.rel (%p143) target = $region12
      $region11: #{tpu_custom_call.1} parent=5 // pred_region
        %s147 = ssub.s32 %s18, 1
        // Predicated region
        $region13: #{tpu_custom_call.1} parent=11 // pred_check
          %p148 = pneg %p65
        $region14: #{tpu_custom_call.1} parent=11 // pred_check_branch
          %150 = sbr.rel (%p148) target = $region16
        $region15: #{tpu_custom_call.1} parent=11 // pred_region
          %s152 = ssub.s32 3072, 3072
          %153 = vsyncadd [#allocation6], %s152
          %s154 = sshll.u32 [#allocation5], 4
          %s155 = int_to_ptr.vmem [resolvable:$true] %s154
          %160 = dma.hbm_to_vmem [thread:$0]  %s1, 3072, %s155, [#allocation6], 64, 64, 4
        $region16: #{tpu_custom_call.1} parent=11 // pred_fallthru
          _
        // Predicated region
        $region17: #{tpu_custom_call.1} parent=11 // pred_check
          %p161 = pneg %p86
        $region18: #{tpu_custom_call.1} parent=11 // pred_check_branch
          %163 = sbr.rel (%p161) target = $region20
        $region19: #{tpu_custom_call.1} parent=11 // pred_region
          %s165 = ssub.s32 3072, 3072
          %166 = vsyncadd [#allocation6], %s165
          %s167 = sshll.u32 [#allocation7], 4
          %s168 = int_to_ptr.vmem [resolvable:$true] %s167
          %173 = dma.hbm_to_vmem [thread:$0]  %s2, 3072, %s168, [#allocation6], 64, 64, 4
        $region20: #{tpu_custom_call.1} parent=11 // pred_fallthru
          _
        // Predicated region
        $region21: #{tpu_custom_call.1} parent=11 // pred_check
          %p174 = pneg %p107
        $region22: #{tpu_custom_call.1} parent=11 // pred_check_branch
          %176 = sbr.rel (%p174) target = $region24
        $region23: #{tpu_custom_call.1} parent=11 // pred_region
          %s178 = ssub.s32 3072, 3072
          %179 = vsyncadd [#allocation9], %s178
          %s180 = sshll.u32 [#allocation8], 4
          %s181 = int_to_ptr.vmem [resolvable:$true] %s180
          %186 = dma.hbm_to_vmem [thread:$0]  %s3, 3072, %s181, [#allocation9], 64, 64, 4
        $region24: #{tpu_custom_call.1} parent=11 // pred_fallthru
          _
      $region12: #{tpu_custom_call.1} parent=5 // pred_fallthru
        _
      %p187 = scmp.lt.s32.totalorder %s18, 2
      // Predicated region
      $region25: #{tpu_custom_call.1} parent=5 // pred_check
        %p188 = pneg %p187
      $region26: #{tpu_custom_call.1} parent=5 // pred_check_branch
        %190 = sbr.rel (%p188) target = $region28
      $region27: #{tpu_custom_call.1} parent=5 // pred_region
        // Predicated region
        $region29: #{tpu_custom_call.1} parent=27 // pred_check
          %p191 = pneg %p38
        $region30: #{tpu_custom_call.1} parent=27 // pred_check_branch
          %193 = sbr.rel (%p191) target = $region32
        $region31: #{tpu_custom_call.1} parent=27 // pred_region
          %s194 = sand.u32 %s28, 1
          %s195 = scalar_lea.sflag [#allocation3], %s194
          %s196 = sand.u32 %s28, 1
          %s197 = smul.addr %s196, 48
          %s198 = scalar_lea.vmem [#allocation2], %s197
          %s200 = ssub.s32 768, 768
          %201 = vsyncadd %s195, %s200
          %s202 = smul.addr %s18, 6
          %s203 = smul.addr %s202, 128
          %s204 = scalar_lea.hbm %s0, %s203
          %s205 = sshll.u32 %s198, 4
          %s206 = int_to_ptr.vmem [resolvable:$true] %s205
          %211 = dma.hbm_to_vmem [thread:$0]  %s204, 768, %s206, %s195, 384, 384, 24
        $region32: #{tpu_custom_call.1} parent=27 // pred_fallthru
          _
      $region28: #{tpu_custom_call.1} parent=5 // pred_fallthru
        _
      %p212 = scmp.le.s32.totalorder 1, %s18
      %p213 = scmp.lt.s32.totalorder %s18, 3
      %p214 = pnand %p212, %p213
      %p215 = pneg %p214
      // Predicated region
      $region33: #{tpu_custom_call.1} parent=5 // pred_check
        _
      $region34: #{tpu_custom_call.1} parent=5 // pred_check_branch
        %217 = sbr.rel (%p214) target = $region36
      $region35: #{tpu_custom_call.1} parent=5 // pred_region
        %s218 = ssub.s32 %s18, 1
        %s219 = sand.u32 %s31, 1
        %s220 = scalar_lea.sflag [#allocation3], %s219
        %s221 = sand.u32 %s31, 1
        %s222 = smul.addr %s221, 48
        %s223 = scalar_lea.vmem [#allocation2], %s222
        // Predicated region
        $region37: #{tpu_custom_call.1} parent=35 // pred_check
          %p224 = pneg %p44
        $region38: #{tpu_custom_call.1} parent=35 // pred_check_branch
          %226 = sbr.rel (%p224) target = $region40
        $region39: #{tpu_custom_call.1} parent=35 // pred_region
          %227 = dma.done %s220, 768
        $region40: #{tpu_custom_call.1} parent=35 // pred_fallthru
          _
        // Predicated region
        $region41: #{tpu_custom_call.1} parent=35 // pred_check
          %p228 = pneg %p65
        $region42: #{tpu_custom_call.1} parent=35 // pred_check_branch
          %230 = sbr.rel (%p228) target = $region44
        $region43: #{tpu_custom_call.1} parent=35 // pred_region
          %231 = dma.done [#allocation6], 3072
        $region44: #{tpu_custom_call.1} parent=35 // pred_fallthru
          _
        // Predicated region
        $region45: #{tpu_custom_call.1} parent=35 // pred_check
          %p232 = pneg %p86
        $region46: #{tpu_custom_call.1} parent=35 // pred_check_branch
          %234 = sbr.rel (%p232) target = $region48
        $region47: #{tpu_custom_call.1} parent=35 // pred_region
          %235 = dma.done [#allocation6], 3072
        $region48: #{tpu_custom_call.1} parent=35 // pred_fallthru
          _
        // Predicated region
        $region49: #{tpu_custom_call.1} parent=35 // pred_check
          %p236 = pneg %p107
        $region50: #{tpu_custom_call.1} parent=35 // pred_check_branch
          %238 = sbr.rel (%p236) target = $region52
        $region51: #{tpu_custom_call.1} parent=35 // pred_region
          %239 = dma.done [#allocation9], 3072
        $region52: #{tpu_custom_call.1} parent=35 // pred_fallthru
          _
        %s240 = sand.u32 %s31, 1
        %s241 = scalar_lea.sflag [#allocation3], %s240
        %s242 = sand.u32 %s31, 1
        %s243 = smul.addr %s242, 48
        %s244 = scalar_lea.vmem [#allocation2], %s243
        %p245 = pneg %p44
        %p246 = pneg %p41
        %p247 = pneg %p65
        %p248 = pneg %p62
        %p249 = pneg %p86
        %p250 = pneg %p83
        %p251 = pneg %p107
        %p252 = pneg %p104
        %p253 = pneg %p133
        %p254 = pneg %p130
        %s255 = sand.u32 %s120, 1
        %s256 = scalar_lea.sflag [#allocation4], %s255
        %s257 = sand.u32 %s120, 1
        %s258 = smul.addr %s257, 16
        %s259 = scalar_lea.vmem [#allocation10], %s258
        %v261 = vld [vmem:[%s223] sm:$0xff]
        %v262 = vld [vmem:[%s223 + $0x8] sm:$0xff]
        %v263 = vld [vmem:[%s223 + $0x10] sm:$0xff]
        %v264 = vld [vmem:[%s223 + $0x18] sm:$0xff]
        %v265 = vld [vmem:[%s223 + $0x20] sm:$0xff]
        %v266 = vld [vmem:[%s223 + $0x28] sm:$0xff]
        %v267 = vpack.c.bf16 %v264, %v261
        %v268 = vpack.c.bf16 %v265, %v262
        %v269 = vpack.c.bf16 %v266, %v263
        %v270 = vld [vmem:[#allocation5] sm:$0xf]
        %v271 = vld [vmem:[#allocation5 + $0x4] sm:$0xf]
        %v272 = vld [vmem:[#allocation5 + $0x8] sm:$0xf]
        %v273 = vld [vmem:[#allocation5 + $0xc] sm:$0xf]
        %v274 = vld [vmem:[#allocation5 + $0x10] sm:$0xf]
        %v275 = vld [vmem:[#allocation5 + $0x14] sm:$0xf]
        %v276 = vld [vmem:[#allocation5 + $0x18] sm:$0xf]
        %v277 = vld [vmem:[#allocation5 + $0x1c] sm:$0xf]
        %v278 = vld [vmem:[#allocation5 + $0x20] sm:$0xf]
        %v279 = vld [vmem:[#allocation5 + $0x24] sm:$0xf]
        %v280 = vld [vmem:[#allocation5 + $0x28] sm:$0xf]
        %v281 = vld [vmem:[#allocation5 + $0x2c] sm:$0xf]
        %v282 = vld [vmem:[#allocation5 + $0x30] sm:$0xf]
        %v283 = vld [vmem:[#allocation5 + $0x34] sm:$0xf]
        %v284 = vld [vmem:[#allocation5 + $0x38] sm:$0xf]
        %v285 = vld [vmem:[#allocation5 + $0x3c] sm:$0xf]
        %v286 = vld [vmem:[#allocation5 + $0x40] sm:$0xf]
        %v287 = vld [vmem:[#allocation5 + $0x44] sm:$0xf]
        %v288 = vld [vmem:[#allocation5 + $0x48] sm:$0xf]
        %v289 = vld [vmem:[#allocation5 + $0x4c] sm:$0xf]
        %v290 = vld [vmem:[#allocation5 + $0x50] sm:$0xf]
        %v291 = vld [vmem:[#allocation5 + $0x54] sm:$0xf]
        %v292 = vld [vmem:[#allocation5 + $0x58] sm:$0xf]
        %v293 = vld [vmem:[#allocation5 + $0x5c] sm:$0xf]
        %v294 = vld [vmem:[#allocation5 + $0x60] sm:$0xf]
        %v295 = vld [vmem:[#allocation5 + $0x64] sm:$0xf]
        %v296 = vld [vmem:[#allocation5 + $0x68] sm:$0xf]
        %v297 = vld [vmem:[#allocation5 + $0x6c] sm:$0xf]
        %v298 = vld [vmem:[#allocation5 + $0x70] sm:$0xf]
        %v299 = vld [vmem:[#allocation5 + $0x74] sm:$0xf]
        %v300 = vld [vmem:[#allocation5 + $0x78] sm:$0xf]
        %v301 = vld [vmem:[#allocation5 + $0x7c] sm:$0xf]
        %v302 = vld [vmem:[#allocation5 + $0x80] sm:$0xf]
        %v303 = vld [vmem:[#allocation5 + $0x84] sm:$0xf]
        %v304 = vld [vmem:[#allocation5 + $0x88] sm:$0xf]
        %v305 = vld [vmem:[#allocation5 + $0x8c] sm:$0xf]
        %v306 = vld [vmem:[#allocation5 + $0x90] sm:$0xf]
        %v307 = vld [vmem:[#allocation5 + $0x94] sm:$0xf]
        %v308 = vld [vmem:[#allocation5 + $0x98] sm:$0xf]
        %v309 = vld [vmem:[#allocation5 + $0x9c] sm:$0xf]
        %v310 = vld [vmem:[#allocation5 + $0xa0] sm:$0xf]
        %v311 = vld [vmem:[#allocation5 + $0xa4] sm:$0xf]
        %v312 = vld [vmem:[#allocation5 + $0xa8] sm:$0xf]
        %v313 = vld [vmem:[#allocation5 + $0xac] sm:$0xf]
        %v314 = vld [vmem:[#allocation5 + $0xb0] sm:$0xf]
        %v315 = vld [vmem:[#allocation5 + $0xb4] sm:$0xf]
        %v316 = vld [vmem:[#allocation5 + $0xb8] sm:$0xf]
        %v317 = vld [vmem:[#allocation5 + $0xbc] sm:$0xf]
        %v366 = vunpack.c.l.b16 %v270
        %v367 = vunpack.c.l.b16 %v271
        %v368 = vunpack.c.l.b16 %v272
        %v369 = vunpack.c.l.b16 %v273
        %v370 = vunpack.c.l.b16 %v274
        %v371 = vunpack.c.l.b16 %v275
        %v372 = vunpack.c.l.b16 %v276
        %v373 = vunpack.c.l.b16 %v277
        %v374 = vunpack.c.l.b16 %v278
        %v375 = vunpack.c.l.b16 %v279
        %v376 = vunpack.c.l.b16 %v280
        %v377 = vunpack.c.l.b16 %v281
        %v378 = vunpack.c.l.b16 %v282
        %v379 = vunpack.c.l.b16 %v283
        %v380 = vunpack.c.l.b16 %v284
        %v381 = vunpack.c.l.b16 %v285
        %v382 = vunpack.c.l.b16 %v286
        %v383 = vunpack.c.l.b16 %v287
        %v384 = vunpack.c.l.b16 %v288
        %v385 = vunpack.c.l.b16 %v289
        %v386 = vunpack.c.l.b16 %v290
        %v387 = vunpack.c.l.b16 %v291
        %v388 = vunpack.c.l.b16 %v292
        %v389 = vunpack.c.l.b16 %v293
        %v390 = vunpack.c.l.b16 %v294
        %v391 = vunpack.c.l.b16 %v295
        %v392 = vunpack.c.l.b16 %v296
        %v393 = vunpack.c.l.b16 %v297
        %v394 = vunpack.c.l.b16 %v298
        %v395 = vunpack.c.l.b16 %v299
        %v396 = vunpack.c.l.b16 %v300
        %v397 = vunpack.c.l.b16 %v301
        %v398 = vunpack.c.l.b16 %v302
        %v399 = vunpack.c.l.b16 %v303
        %v400 = vunpack.c.l.b16 %v304
        %v401 = vunpack.c.l.b16 %v305
        %v402 = vunpack.c.l.b16 %v306
        %v403 = vunpack.c.l.b16 %v307
        %v404 = vunpack.c.l.b16 %v308
        %v405 = vunpack.c.l.b16 %v309
        %v406 = vunpack.c.l.b16 %v310
        %v407 = vunpack.c.l.b16 %v311
        %v408 = vunpack.c.l.b16 %v312
        %v409 = vunpack.c.l.b16 %v313
        %v410 = vunpack.c.l.b16 %v314
        %v411 = vunpack.c.l.b16 %v315
        %v412 = vunpack.c.l.b16 %v316
        %v413 = vunpack.c.l.b16 %v317
        %v414 = vpack.c.b16 %v367, %v366
        %v415 = vpack.c.b16 %v369, %v368
        %v416 = vpack.c.b16 %v371, %v370
        %v417 = vpack.c.b16 %v373, %v372
        %v418 = vpack.c.b16 %v375, %v374
        %v419 = vpack.c.b16 %v377, %v376
        %v420 = vpack.c.b16 %v379, %v378
        %v421 = vpack.c.b16 %v381, %v380
        %v422 = vpack.c.b16 %v383, %v382
        %v423 = vpack.c.b16 %v385, %v384
        %v424 = vpack.c.b16 %v387, %v386
        %v425 = vpack.c.b16 %v389, %v388
        %v426 = vpack.c.b16 %v391, %v390
        %v427 = vpack.c.b16 %v393, %v392
        %v428 = vpack.c.b16 %v395, %v394
        %v429 = vpack.c.b16 %v397, %v396
        %v430 = vpack.c.b16 %v399, %v398
        %v431 = vpack.c.b16 %v401, %v400
        %v432 = vpack.c.b16 %v403, %v402
        %v433 = vpack.c.b16 %v405, %v404
        %v434 = vpack.c.b16 %v407, %v406
        %v435 = vpack.c.b16 %v409, %v408
        %v436 = vpack.c.b16 %v411, %v410
        %v437 = vpack.c.b16 %v413, %v412
        %462 = vmatprep.subr.bf16.mxu0 0
        %463 = vmatpush1.bf16.msra.mxu0 %v421
        %464 = vmatprep.subr.bf16.mxu0 0
        %465 = vmatpush1.bf16.msra.mxu0 %v420
        %466 = vmatprep.subr.bf16.mxu0 0
        %467 = vmatpush1.bf16.msra.mxu0 %v419
        %468 = vmatprep.subr.bf16.mxu0 0
        %469 = vmatpush1.bf16.msra.mxu0 %v418
        %470 = vmatprep.subr.bf16.mxu0 0
        %471 = vmatpush1.bf16.msra.mxu0 %v417
        %472 = vmatprep.subr.bf16.mxu0 0
        %473 = vmatpush1.bf16.msra.mxu0 %v416
        %474 = vmatprep.subr.bf16.mxu0 0
        %475 = vmatpush1.bf16.msra.mxu0 %v415
        %476 = vmatprep.subr.bf16.mxu0 0
        %477 = vmatpush1.bf16.msra.mxu0 %v414
        %478 = vmatprep.subr.bf16.mxu0 0
        %479 = vmatpush2.bf16.msra.mxu0 %v429
        %480 = vmatprep.subr.bf16.mxu0 0
        %481 = vmatpush2.bf16.msra.mxu0 %v428
        %482 = vmatprep.subr.bf16.mxu0 0
        %483 = vmatpush2.bf16.msra.mxu0 %v427
        %484 = vmatprep.subr.bf16.mxu0 0
        %485 = vmatpush2.bf16.msra.mxu0 %v426
        %486 = vmatprep.subr.bf16.mxu0 0
        %487 = vmatpush2.bf16.msra.mxu0 %v425
        %488 = vmatprep.subr.bf16.mxu0 0
        %489 = vmatpush2.bf16.msra.mxu0 %v424
        %490 = vmatprep.subr.bf16.mxu0 0
        %491 = vmatpush2.bf16.msra.mxu0 %v423
        %492 = vmatprep.subr.bf16.mxu0 0
        %493 = vmatpush2.bf16.msra.mxu0 %v422
        %494 = vmatprep.mubr.bf16.mxu0 %v268
        %495 = vmatmul.mubr.bf16.gmra.mxu0 %v267
        %v496 = vpop.f32.mrf.mxu0
        %v497 = vadd.f32 0.0, %v496
        %v498 = vpop.f32.mrf.mxu0
        %v499 = vpop.f32.mrf.mxu0
        %v500 = vadd.f32 0.0, %v499
        %v501 = vpop.f32.mrf.mxu0
        %502 = vdwg.mxu0
        %503 = vmatprep.subr.bf16.mxu0 0
        %504 = vmatpush1.bf16.msra.mxu0 %v437
        %505 = vmatprep.subr.bf16.mxu0 0
        %506 = vmatpush1.bf16.msra.mxu0 %v436
        %507 = vmatprep.subr.bf16.mxu0 0
        %508 = vmatpush1.bf16.msra.mxu0 %v435
        %509 = vmatprep.subr.bf16.mxu0 0
        %510 = vmatpush1.bf16.msra.mxu0 %v434
        %511 = vmatprep.subr.bf16.mxu0 0
        %512 = vmatpush1.bf16.msra.mxu0 %v433
        %513 = vmatprep.subr.bf16.mxu0 0
        %514 = vmatpush1.bf16.msra.mxu0 %v432
        %515 = vmatprep.subr.bf16.mxu0 0
        %516 = vmatpush1.bf16.msra.mxu0 %v431
        %517 = vmatprep.subr.bf16.mxu0 0
        %518 = vmatpush1.bf16.msra.mxu0 %v430
        %519 = vmatprep.subr.bf16.mxu0 0
        %520 = vmatpush2.bf16.msra.mxu0 0
        %521 = vmatprep.subr.bf16.mxu0 0
        %522 = vmatpush2.bf16.msra.mxu0 0
        %523 = vmatprep.subr.bf16.mxu0 0
        %524 = vmatpush2.bf16.msra.mxu0 0
        %525 = vmatprep.subr.bf16.mxu0 0
        %526 = vmatpush2.bf16.msra.mxu0 0
        %527 = vmatprep.subr.bf16.mxu0 0
        %528 = vmatpush2.bf16.msra.mxu0 0
        %529 = vmatprep.subr.bf16.mxu0 0
        %530 = vmatpush2.bf16.msra.mxu0 0
        %531 = vmatprep.subr.bf16.mxu0 0
        %532 = vmatpush2.bf16.msra.mxu0 0
        %533 = vmatprep.subr.bf16.mxu0 0
        %534 = vmatpush2.bf16.msra.mxu0 0
        %535 = vmatprep.mubr.bf16.mxu0 0
        %536 = vmatmul.mubr.bf16.gmra.mxu0 %v269
        %v537 = vpop.f32.mrf.mxu0
        %v538 = vadd.f32 %v497, %v537
        %v539 = vpop.f32.mrf.mxu0
        %v540 = vpop.f32.mrf.mxu0
        %v541 = vadd.f32 %v500, %v540
        %v542 = vpop.f32.mrf.mxu0
        %543 = vdwg.mxu0
        %v544 = vld [vmem:[#allocation7] sm:$0xf]
        %v545 = vld [vmem:[#allocation7 + $0x4] sm:$0xf]
        %v546 = vld [vmem:[#allocation7 + $0x8] sm:$0xf]
        %v547 = vld [vmem:[#allocation7 + $0xc] sm:$0xf]
        %v548 = vld [vmem:[#allocation7 + $0x10] sm:$0xf]
        %v549 = vld [vmem:[#allocation7 + $0x14] sm:$0xf]
        %v550 = vld [vmem:[#allocation7 + $0x18] sm:$0xf]
        %v551 = vld [vmem:[#allocation7 + $0x1c] sm:$0xf]
        %v552 = vld [vmem:[#allocation7 + $0x20] sm:$0xf]
        %v553 = vld [vmem:[#allocation7 + $0x24] sm:$0xf]
        %v554 = vld [vmem:[#allocation7 + $0x28] sm:$0xf]
        %v555 = vld [vmem:[#allocation7 + $0x2c] sm:$0xf]
        %v556 = vld [vmem:[#allocation7 + $0x30] sm:$0xf]
        %v557 = vld [vmem:[#allocation7 + $0x34] sm:$0xf]
        %v558 = vld [vmem:[#allocation7 + $0x38] sm:$0xf]
        %v559 = vld [vmem:[#allocation7 + $0x3c] sm:$0xf]
        %v560 = vld [vmem:[#allocation7 + $0x40] sm:$0xf]
        %v561 = vld [vmem:[#allocation7 + $0x44] sm:$0xf]
        %v562 = vld [vmem:[#allocation7 + $0x48] sm:$0xf]
        %v563 = vld [vmem:[#allocation7 + $0x4c] sm:$0xf]
        %v564 = vld [vmem:[#allocation7 + $0x50] sm:$0xf]
        %v565 = vld [vmem:[#allocation7 + $0x54] sm:$0xf]
        %v566 = vld [vmem:[#allocation7 + $0x58] sm:$0xf]
        %v567 = vld [vmem:[#allocation7 + $0x5c] sm:$0xf]
        %v568 = vld [vmem:[#allocation7 + $0x60] sm:$0xf]
        %v569 = vld [vmem:[#allocation7 + $0x64] sm:$0xf]
        %v570 = vld [vmem:[#allocation7 + $0x68] sm:$0xf]
        %v571 = vld [vmem:[#allocation7 + $0x6c] sm:$0xf]
        %v572 = vld [vmem:[#allocation7 + $0x70] sm:$0xf]
        %v573 = vld [vmem:[#allocation7 + $0x74] sm:$0xf]
        %v574 = vld [vmem:[#allocation7 + $0x78] sm:$0xf]
        %v575 = vld [vmem:[#allocation7 + $0x7c] sm:$0xf]
        %v576 = vld [vmem:[#allocation7 + $0x80] sm:$0xf]
        %v577 = vld [vmem:[#allocation7 + $0x84] sm:$0xf]
        %v578 = vld [vmem:[#allocation7 + $0x88] sm:$0xf]
        %v579 = vld [vmem:[#allocation7 + $0x8c] sm:$0xf]
        %v580 = vld [vmem:[#allocation7 + $0x90] sm:$0xf]
        %v581 = vld [vmem:[#allocation7 + $0x94] sm:$0xf]
        %v582 = vld [vmem:[#allocation7 + $0x98] sm:$0xf]
        %v583 = vld [vmem:[#allocation7 + $0x9c] sm:$0xf]
        %v584 = vld [vmem:[#allocation7 + $0xa0] sm:$0xf]
        %v585 = vld [vmem:[#allocation7 + $0xa4] sm:$0xf]
        %v586 = vld [vmem:[#allocation7 + $0xa8] sm:$0xf]
        %v587 = vld [vmem:[#allocation7 + $0xac] sm:$0xf]
        %v588 = vld [vmem:[#allocation7 + $0xb0] sm:$0xf]
        %v589 = vld [vmem:[#allocation7 + $0xb4] sm:$0xf]
        %v590 = vld [vmem:[#allocation7 + $0xb8] sm:$0xf]
        %v591 = vld [vmem:[#allocation7 + $0xbc] sm:$0xf]
        %v640 = vunpack.c.l.b16 %v544
        %v641 = vunpack.c.l.b16 %v545
        %v642 = vunpack.c.l.b16 %v546
        %v643 = vunpack.c.l.b16 %v547
        %v644 = vunpack.c.l.b16 %v548
        %v645 = vunpack.c.l.b16 %v549
        %v646 = vunpack.c.l.b16 %v550
        %v647 = vunpack.c.l.b16 %v551
        %v648 = vunpack.c.l.b16 %v552
        %v649 = vunpack.c.l.b16 %v553
        %v650 = vunpack.c.l.b16 %v554
        %v651 = vunpack.c.l.b16 %v555
        %v652 = vunpack.c.l.b16 %v556
        %v653 = vunpack.c.l.b16 %v557
        %v654 = vunpack.c.l.b16 %v558
        %v655 = vunpack.c.l.b16 %v559
        %v656 = vunpack.c.l.b16 %v560
        %v657 = vunpack.c.l.b16 %v561
        %v658 = vunpack.c.l.b16 %v562
        %v659 = vunpack.c.l.b16 %v563
        %v660 = vunpack.c.l.b16 %v564
        %v661 = vunpack.c.l.b16 %v565
        %v662 = vunpack.c.l.b16 %v566
        %v663 = vunpack.c.l.b16 %v567
        %v664 = vunpack.c.l.b16 %v568
        %v665 = vunpack.c.l.b16 %v569
        %v666 = vunpack.c.l.b16 %v570
        %v667 = vunpack.c.l.b16 %v571
        %v668 = vunpack.c.l.b16 %v572
        %v669 = vunpack.c.l.b16 %v573
        %v670 = vunpack.c.l.b16 %v574
        %v671 = vunpack.c.l.b16 %v575
        %v672 = vunpack.c.l.b16 %v576
        %v673 = vunpack.c.l.b16 %v577
        %v674 = vunpack.c.l.b16 %v578
        %v675 = vunpack.c.l.b16 %v579
        %v676 = vunpack.c.l.b16 %v580
        %v677 = vunpack.c.l.b16 %v581
        %v678 = vunpack.c.l.b16 %v582
        %v679 = vunpack.c.l.b16 %v583
        %v680 = vunpack.c.l.b16 %v584
        %v681 = vunpack.c.l.b16 %v585
        %v682 = vunpack.c.l.b16 %v586
        %v683 = vunpack.c.l.b16 %v587
        %v684 = vunpack.c.l.b16 %v588
        %v685 = vunpack.c.l.b16 %v589
        %v686 = vunpack.c.l.b16 %v590
        %v687 = vunpack.c.l.b16 %v591
        %v688 = vpack.c.b16 %v641, %v640
        %v689 = vpack.c.b16 %v643, %v642
        %v690 = vpack.c.b16 %v645, %v644
        %v691 = vpack.c.b16 %v647, %v646
        %v692 = vpack.c.b16 %v649, %v648
        %v693 = vpack.c.b16 %v651, %v650
        %v694 = vpack.c.b16 %v653, %v652
        %v695 = vpack.c.b16 %v655, %v654
        %v696 = vpack.c.b16 %v657, %v656
        %v697 = vpack.c.b16 %v659, %v658
        %v698 = vpack.c.b16 %v661, %v660
        %v699 = vpack.c.b16 %v663, %v662
        %v700 = vpack.c.b16 %v665, %v664
        %v701 = vpack.c.b16 %v667, %v666
        %v702 = vpack.c.b16 %v669, %v668
        %v703 = vpack.c.b16 %v671, %v670
        %v704 = vpack.c.b16 %v673, %v672
        %v705 = vpack.c.b16 %v675, %v674
        %v706 = vpack.c.b16 %v677, %v676
        %v707 = vpack.c.b16 %v679, %v678
        %v708 = vpack.c.b16 %v681, %v680
        %v709 = vpack.c.b16 %v683, %v682
        %v710 = vpack.c.b16 %v685, %v684
        %v711 = vpack.c.b16 %v687, %v686
        %736 = vmatprep.subr.bf16.mxu0 0
        %737 = vmatpush1.bf16.msra.mxu0 %v695
        %738 = vmatprep.subr.bf16.mxu0 0
        %739 = vmatpush1.bf16.msra.mxu0 %v694
        %740 = vmatprep.subr.bf16.mxu0 0
        %741 = vmatpush1.bf16.msra.mxu0 %v693
        %742 = vmatprep.subr.bf16.mxu0 0
        %743 = vmatpush1.bf16.msra.mxu0 %v692
        %744 = vmatprep.subr.bf16.mxu0 0
        %745 = vmatpush1.bf16.msra.mxu0 %v691
        %746 = vmatprep.subr.bf16.mxu0 0
        %747 = vmatpush1.bf16.msra.mxu0 %v690
        %748 = vmatprep.subr.bf16.mxu0 0
        %749 = vmatpush1.bf16.msra.mxu0 %v689
        %750 = vmatprep.subr.bf16.mxu0 0
        %751 = vmatpush1.bf16.msra.mxu0 %v688
        %752 = vmatprep.subr.bf16.mxu0 0
        %753 = vmatpush2.bf16.msra.mxu0 %v703
        %754 = vmatprep.subr.bf16.mxu0 0
        %755 = vmatpush2.bf16.msra.mxu0 %v702
        %756 = vmatprep.subr.bf16.mxu0 0
        %757 = vmatpush2.bf16.msra.mxu0 %v701
        %758 = vmatprep.subr.bf16.mxu0 0
        %759 = vmatpush2.bf16.msra.mxu0 %v700
        %760 = vmatprep.subr.bf16.mxu0 0
        %761 = vmatpush2.bf16.msra.mxu0 %v699
        %762 = vmatprep.subr.bf16.mxu0 0
        %763 = vmatpush2.bf16.msra.mxu0 %v698
        %764 = vmatprep.subr.bf16.mxu0 0
        %765 = vmatpush2.bf16.msra.mxu0 %v697
        %766 = vmatprep.subr.bf16.mxu0 0
        %767 = vmatpush2.bf16.msra.mxu0 %v696
        %768 = vmatprep.mubr.bf16.mxu0 %v268
        %769 = vmatmul.mubr.bf16.gmra.mxu0 %v267
        %v770 = vpop.f32.mrf.mxu0
        %v771 = vadd.f32 0.0, %v770
        %v772 = vpop.f32.mrf.mxu0
        %v773 = vpop.f32.mrf.mxu0
        %v774 = vadd.f32 0.0, %v773
        %v775 = vpop.f32.mrf.mxu0
        %776 = vdwg.mxu0
        %777 = vmatprep.subr.bf16.mxu0 0
        %778 = vmatpush1.bf16.msra.mxu0 %v711
        %779 = vmatprep.subr.bf16.mxu0 0
        %780 = vmatpush1.bf16.msra.mxu0 %v710
        %781 = vmatprep.subr.bf16.mxu0 0
        %782 = vmatpush1.bf16.msra.mxu0 %v709
        %783 = vmatprep.subr.bf16.mxu0 0
        %784 = vmatpush1.bf16.msra.mxu0 %v708
        %785 = vmatprep.subr.bf16.mxu0 0
        %786 = vmatpush1.bf16.msra.mxu0 %v707
        %787 = vmatprep.subr.bf16.mxu0 0
        %788 = vmatpush1.bf16.msra.mxu0 %v706
        %789 = vmatprep.subr.bf16.mxu0 0
        %790 = vmatpush1.bf16.msra.mxu0 %v705
        %791 = vmatprep.subr.bf16.mxu0 0
        %792 = vmatpush1.bf16.msra.mxu0 %v704
        %793 = vmatprep.subr.bf16.mxu0 0
        %794 = vmatpush2.bf16.msra.mxu0 0
        %795 = vmatprep.subr.bf16.mxu0 0
        %796 = vmatpush2.bf16.msra.mxu0 0
        %797 = vmatprep.subr.bf16.mxu0 0
        %798 = vmatpush2.bf16.msra.mxu0 0
        %799 = vmatprep.subr.bf16.mxu0 0
        %800 = vmatpush2.bf16.msra.mxu0 0
        %801 = vmatprep.subr.bf16.mxu0 0
        %802 = vmatpush2.bf16.msra.mxu0 0
        %803 = vmatprep.subr.bf16.mxu0 0
        %804 = vmatpush2.bf16.msra.mxu0 0
        %805 = vmatprep.subr.bf16.mxu0 0
        %806 = vmatpush2.bf16.msra.mxu0 0
        %807 = vmatprep.subr.bf16.mxu0 0
        %808 = vmatpush2.bf16.msra.mxu0 0
        %809 = vmatprep.mubr.bf16.mxu0 0
        %810 = vmatmul.mubr.bf16.gmra.mxu0 %v269
        %v811 = vpop.f32.mrf.mxu0
        %v812 = vadd.f32 %v771, %v811
        %v813 = vpop.f32.mrf.mxu0
        %v814 = vpop.f32.mrf.mxu0
        %v815 = vadd.f32 %v774, %v814
        %v816 = vpop.f32.mrf.mxu0
        %817 = vdwg.mxu0
        %v818 = vld [vmem:[#allocation8] sm:$0xf]
        %v819 = vld [vmem:[#allocation8 + $0x4] sm:$0xf]
        %v820 = vld [vmem:[#allocation8 + $0x8] sm:$0xf]
        %v821 = vld [vmem:[#allocation8 + $0xc] sm:$0xf]
        %v822 = vld [vmem:[#allocation8 + $0x10] sm:$0xf]
        %v823 = vld [vmem:[#allocation8 + $0x14] sm:$0xf]
        %v824 = vld [vmem:[#allocation8 + $0x18] sm:$0xf]
        %v825 = vld [vmem:[#allocation8 + $0x1c] sm:$0xf]
        %v826 = vld [vmem:[#allocation8 + $0x20] sm:$0xf]
        %v827 = vld [vmem:[#allocation8 + $0x24] sm:$0xf]
        %v828 = vld [vmem:[#allocation8 + $0x28] sm:$0xf]
        %v829 = vld [vmem:[#allocation8 + $0x2c] sm:$0xf]
        %v830 = vld [vmem:[#allocation8 + $0x30] sm:$0xf]
        %v831 = vld [vmem:[#allocation8 + $0x34] sm:$0xf]
        %v832 = vld [vmem:[#allocation8 + $0x38] sm:$0xf]
        %v833 = vld [vmem:[#allocation8 + $0x3c] sm:$0xf]
        %v834 = vld [vmem:[#allocation8 + $0x40] sm:$0xf]
        %v835 = vld [vmem:[#allocation8 + $0x44] sm:$0xf]
        %v836 = vld [vmem:[#allocation8 + $0x48] sm:$0xf]
        %v837 = vld [vmem:[#allocation8 + $0x4c] sm:$0xf]
        %v838 = vld [vmem:[#allocation8 + $0x50] sm:$0xf]
        %v839 = vld [vmem:[#allocation8 + $0x54] sm:$0xf]
        %v840 = vld [vmem:[#allocation8 + $0x58] sm:$0xf]
        %v841 = vld [vmem:[#allocation8 + $0x5c] sm:$0xf]
        %v842 = vld [vmem:[#allocation8 + $0x60] sm:$0xf]
        %v843 = vld [vmem:[#allocation8 + $0x64] sm:$0xf]
        %v844 = vld [vmem:[#allocation8 + $0x68] sm:$0xf]
        %v845 = vld [vmem:[#allocation8 + $0x6c] sm:$0xf]
        %v846 = vld [vmem:[#allocation8 + $0x70] sm:$0xf]
        %v847 = vld [vmem:[#allocation8 + $0x74] sm:$0xf]
        %v848 = vld [vmem:[#allocation8 + $0x78] sm:$0xf]
        %v849 = vld [vmem:[#allocation8 + $0x7c] sm:$0xf]
        %v850 = vld [vmem:[#allocation8 + $0x80] sm:$0xf]
        %v851 = vld [vmem:[#allocation8 + $0x84] sm:$0xf]
        %v852 = vld [vmem:[#allocation8 + $0x88] sm:$0xf]
        %v853 = vld [vmem:[#allocation8 + $0x8c] sm:$0xf]
        %v854 = vld [vmem:[#allocation8 + $0x90] sm:$0xf]
        %v855 = vld [vmem:[#allocation8 + $0x94] sm:$0xf]
        %v856 = vld [vmem:[#allocation8 + $0x98] sm:$0xf]
        %v857 = vld [vmem:[#allocation8 + $0x9c] sm:$0xf]
        %v858 = vld [vmem:[#allocation8 + $0xa0] sm:$0xf]
        %v859 = vld [vmem:[#allocation8 + $0xa4] sm:$0xf]
        %v860 = vld [vmem:[#allocation8 + $0xa8] sm:$0xf]
        %v861 = vld [vmem:[#allocation8 + $0xac] sm:$0xf]
        %v862 = vld [vmem:[#allocation8 + $0xb0] sm:$0xf]
        %v863 = vld [vmem:[#allocation8 + $0xb4] sm:$0xf]
        %v864 = vld [vmem:[#allocation8 + $0xb8] sm:$0xf]
        %v865 = vld [vmem:[#allocation8 + $0xbc] sm:$0xf]
        %v914 = vunpack.c.l.b16 %v818
        %v915 = vunpack.c.l.b16 %v819
        %v916 = vunpack.c.l.b16 %v820
        %v917 = vunpack.c.l.b16 %v821
        %v918 = vunpack.c.l.b16 %v822
        %v919 = vunpack.c.l.b16 %v823
        %v920 = vunpack.c.l.b16 %v824
        %v921 = vunpack.c.l.b16 %v825
        %v922 = vunpack.c.l.b16 %v826
        %v923 = vunpack.c.l.b16 %v827
        %v924 = vunpack.c.l.b16 %v828
        %v925 = vunpack.c.l.b16 %v829
        %v926 = vunpack.c.l.b16 %v830
        %v927 = vunpack.c.l.b16 %v831
        %v928 = vunpack.c.l.b16 %v832
        %v929 = vunpack.c.l.b16 %v833
        %v930 = vunpack.c.l.b16 %v834
        %v931 = vunpack.c.l.b16 %v835
        %v932 = vunpack.c.l.b16 %v836
        %v933 = vunpack.c.l.b16 %v837
        %v934 = vunpack.c.l.b16 %v838
        %v935 = vunpack.c.l.b16 %v839
        %v936 = vunpack.c.l.b16 %v840
        %v937 = vunpack.c.l.b16 %v841
        %v938 = vunpack.c.l.b16 %v842
        %v939 = vunpack.c.l.b16 %v843
        %v940 = vunpack.c.l.b16 %v844
        %v941 = vunpack.c.l.b16 %v845
        %v942 = vunpack.c.l.b16 %v846
        %v943 = vunpack.c.l.b16 %v847
        %v944 = vunpack.c.l.b16 %v848
        %v945 = vunpack.c.l.b16 %v849
        %v946 = vunpack.c.l.b16 %v850
        %v947 = vunpack.c.l.b16 %v851
        %v948 = vunpack.c.l.b16 %v852
        %v949 = vunpack.c.l.b16 %v853
        %v950 = vunpack.c.l.b16 %v854
        %v951 = vunpack.c.l.b16 %v855
        %v952 = vunpack.c.l.b16 %v856
        %v953 = vunpack.c.l.b16 %v857
        %v954 = vunpack.c.l.b16 %v858
        %v955 = vunpack.c.l.b16 %v859
        %v956 = vunpack.c.l.b16 %v860
        %v957 = vunpack.c.l.b16 %v861
        %v958 = vunpack.c.l.b16 %v862
        %v959 = vunpack.c.l.b16 %v863
        %v960 = vunpack.c.l.b16 %v864
        %v961 = vunpack.c.l.b16 %v865
        %v962 = vpack.c.b16 %v915, %v914
        %v963 = vpack.c.b16 %v917, %v916
        %v964 = vpack.c.b16 %v919, %v918
        %v965 = vpack.c.b16 %v921, %v920
        %v966 = vpack.c.b16 %v923, %v922
        %v967 = vpack.c.b16 %v925, %v924
        %v968 = vpack.c.b16 %v927, %v926
        %v969 = vpack.c.b16 %v929, %v928
        %v970 = vpack.c.b16 %v931, %v930
        %v971 = vpack.c.b16 %v933, %v932
        %v972 = vpack.c.b16 %v935, %v934
        %v973 = vpack.c.b16 %v937, %v936
        %v974 = vpack.c.b16 %v939, %v938
        %v975 = vpack.c.b16 %v941, %v940
        %v976 = vpack.c.b16 %v943, %v942
        %v977 = vpack.c.b16 %v945, %v944
        %v978 = vpack.c.b16 %v947, %v946
        %v979 = vpack.c.b16 %v949, %v948
        %v980 = vpack.c.b16 %v951, %v950
        %v981 = vpack.c.b16 %v953, %v952
        %v982 = vpack.c.b16 %v955, %v954
        %v983 = vpack.c.b16 %v957, %v956
        %v984 = vpack.c.b16 %v959, %v958
        %v985 = vpack.c.b16 %v961, %v960
        %1010 = vmatprep.subr.bf16.mxu0 0
        %1011 = vmatpush1.bf16.msra.mxu0 %v969
        %1012 = vmatprep.subr.bf16.mxu0 0
        %1013 = vmatpush1.bf16.msra.mxu0 %v968
        %1014 = vmatprep.subr.bf16.mxu0 0
        %1015 = vmatpush1.bf16.msra.mxu0 %v967
        %1016 = vmatprep.subr.bf16.mxu0 0
        %1017 = vmatpush1.bf16.msra.mxu0 %v966
        %1018 = vmatprep.subr.bf16.mxu0 0
        %1019 = vmatpush1.bf16.msra.mxu0 %v965
        %1020 = vmatprep.subr.bf16.mxu0 0
        %1021 = vmatpush1.bf16.msra.mxu0 %v964
        %1022 = vmatprep.subr.bf16.mxu0 0
        %1023 = vmatpush1.bf16.msra.mxu0 %v963
        %1024 = vmatprep.subr.bf16.mxu0 0
        %1025 = vmatpush1.bf16.msra.mxu0 %v962
        %1026 = vmatprep.subr.bf16.mxu0 0
        %1027 = vmatpush2.bf16.msra.mxu0 %v977
        %1028 = vmatprep.subr.bf16.mxu0 0
        %1029 = vmatpush2.bf16.msra.mxu0 %v976
        %1030 = vmatprep.subr.bf16.mxu0 0
        %1031 = vmatpush2.bf16.msra.mxu0 %v975
        %1032 = vmatprep.subr.bf16.mxu0 0
        %1033 = vmatpush2.bf16.msra.mxu0 %v974
        %1034 = vmatprep.subr.bf16.mxu0 0
        %1035 = vmatpush2.bf16.msra.mxu0 %v973
        %1036 = vmatprep.subr.bf16.mxu0 0
        %1037 = vmatpush2.bf16.msra.mxu0 %v972
        %1038 = vmatprep.subr.bf16.mxu0 0
        %1039 = vmatpush2.bf16.msra.mxu0 %v971
        %1040 = vmatprep.subr.bf16.mxu0 0
        %1041 = vmatpush2.bf16.msra.mxu0 %v970
        %1042 = vmatprep.mubr.bf16.mxu0 %v268
        %1043 = vmatmul.mubr.bf16.gmra.mxu0 %v267
        %v1044 = vpop.f32.mrf.mxu0
        %v1045 = vadd.f32 0.0, %v1044
        %v1046 = vpop.f32.mrf.mxu0
        %v1047 = vpop.f32.mrf.mxu0
        %v1048 = vadd.f32 0.0, %v1047
        %v1049 = vpop.f32.mrf.mxu0
        %1050 = vdwg.mxu0
        %1051 = vmatprep.subr.bf16.mxu0 0
        %1052 = vmatpush1.bf16.msra.mxu0 %v985
        %1053 = vmatprep.subr.bf16.mxu0 0
        %1054 = vmatpush1.bf16.msra.mxu0 %v984
        %1055 = vmatprep.subr.bf16.mxu0 0
        %1056 = vmatpush1.bf16.msra.mxu0 %v983
        %1057 = vmatprep.subr.bf16.mxu0 0
        %1058 = vmatpush1.bf16.msra.mxu0 %v982
        %1059 = vmatprep.subr.bf16.mxu0 0
        %1060 = vmatpush1.bf16.msra.mxu0 %v981
        %1061 = vmatprep.subr.bf16.mxu0 0
        %1062 = vmatpush1.bf16.msra.mxu0 %v980
        %1063 = vmatprep.subr.bf16.mxu0 0
        %1064 = vmatpush1.bf16.msra.mxu0 %v979
        %1065 = vmatprep.subr.bf16.mxu0 0
        %1066 = vmatpush1.bf16.msra.mxu0 %v978
        %1067 = vmatprep.subr.bf16.mxu0 0
        %1068 = vmatpush2.bf16.msra.mxu0 0
        %1069 = vmatprep.subr.bf16.mxu0 0
        %1070 = vmatpush2.bf16.msra.mxu0 0
        %1071 = vmatprep.subr.bf16.mxu0 0
        %1072 = vmatpush2.bf16.msra.mxu0 0
        %1073 = vmatprep.subr.bf16.mxu0 0
        %1074 = vmatpush2.bf16.msra.mxu0 0
        %1075 = vmatprep.subr.bf16.mxu0 0
        %1076 = vmatpush2.bf16.msra.mxu0 0
        %1077 = vmatprep.subr.bf16.mxu0 0
        %1078 = vmatpush2.bf16.msra.mxu0 0
        %1079 = vmatprep.subr.bf16.mxu0 0
        %1080 = vmatpush2.bf16.msra.mxu0 0
        %1081 = vmatprep.subr.bf16.mxu0 0
        %1082 = vmatpush2.bf16.msra.mxu0 0
        %1083 = vmatprep.mubr.bf16.mxu0 0
        %1084 = vmatmul.mubr.bf16.gmra.mxu0 %v269
        %v1085 = vpop.f32.mrf.mxu0
        %v1086 = vadd.f32 %v1045, %v1085
        %v1087 = vpop.f32.mrf.mxu0
        %v1088 = vpop.f32.mrf.mxu0
        %v1089 = vadd.f32 %v1048, %v1088
        %v1090 = vpop.f32.mrf.mxu0
        %1091 = vdwg.mxu0
        %v1092 = vpack.c.bf16 %v541, %v538
        %v1093 = vpack.c.bf16 %v815, %v812
        %1094 = vmatprep.subr.bf16.mxu0 0
        %1095 = vmatpush1.bf16.xpose.msra.mxu0 0
        %1096 = vmatprep.subr.bf16.mxu0 0
        %1097 = vmatpush1.bf16.xpose.msra.mxu0 0
        %1098 = vmatprep.subr.bf16.mxu0 0
        %1099 = vmatpush1.bf16.xpose.msra.mxu0 0
        %1100 = vmatprep.subr.bf16.mxu0 0
        %1101 = vmatpush1.bf16.xpose.msra.mxu0 0
        %1102 = vmatprep.subr.bf16.mxu0 0
        %1103 = vmatpush1.bf16.xpose.msra.mxu0 0
        %1104 = vmatprep.subr.bf16.mxu0 0
        %1105 = vmatpush1.bf16.xpose.msra.mxu0 0
        %1106 = vmatprep.subr.bf16.mxu0 0
        %1107 = vmatpush1.bf16.xpose.msra.mxu0 0
        %1108 = vmatprep.subr.bf16.mxu0 0
        %1109 = vmatpush1.bf16.xpose.msra.mxu0 %v1093
        %1110 = vmatprep.subr.bf16.mxu0 0
        %1111 = vmatpush2.bf16.xpose.msra.mxu0 0
        %1112 = vmatprep.subr.bf16.mxu0 0
        %1113 = vmatpush2.bf16.xpose.msra.mxu0 0
        %1114 = vmatprep.subr.bf16.mxu0 0
        %1115 = vmatpush2.bf16.xpose.msra.mxu0 0
        %1116 = vmatprep.subr.bf16.mxu0 0
        %1117 = vmatpush2.bf16.xpose.msra.mxu0 0
        %1118 = vmatprep.subr.bf16.mxu0 0
        %1119 = vmatpush2.bf16.xpose.msra.mxu0 0
        %1120 = vmatprep.subr.bf16.mxu0 0
        %1121 = vmatpush2.bf16.xpose.msra.mxu0 0
        %1122 = vmatprep.subr.bf16.mxu0 0
        %1123 = vmatpush2.bf16.xpose.msra.mxu0 0
        %1124 = vmatprep.subr.bf16.mxu0 0
        %1125 = vmatpush2.bf16.xpose.msra.mxu0 0
        %1126 = vmatprep.mubr.bf16.mxu0 0
        %1127 = vmatmul.mubr.bf16.gmra.mxu0 %v1092
        %v1128 = vpop.f32.mrf.mxu0
        %v1129 = vadd.f32 0.0, %v1128
        %v1130 = vpop.f32.mrf.mxu0
        %v1131 = vpop.f32.mrf.mxu0
        %v1132 = vadd.f32 0.0, %v1131
        %v1133 = vpop.f32.mrf.mxu0
        %1134 = vdwg.mxu0
        %v1135 = vmul.f32 %v1129, 0.125
        %v1136 = vmul.f32 %v1132, 0.125
        %v1137 = vlaneseq
        %v1138 = vshrl.u32 %v1137, 7
        %v1139 = vadd.s32 %v1138, 8
        %v1140 = vlaneseq
        %v1141 = vand.u32 %v1140, 127
        %vm1142 = vcmp.le.s32.totalorder %v1141, %v1138
        %vm1143 = vcmp.le.s32.totalorder %v1141, %v1139
        %v1144 = vsel %vm1142, %v1135, -inf
        %v1145 = vsel %vm1143, %v1136, -inf
        %vm1146 = vcmask 130048
        %v1147 = vsel %vm1146, %v1144, -inf
        %1148 = vmax.xlane.f32.xlu0 %v1147
        %v1149 = vpop.xlane.xlu0 %1148
        %v1150 = vsel %vm1146, %v1145, -inf
        %1151 = vmax.xlane.f32.xlu0 %v1150
        %v1152 = vpop.xlane.xlu0 %1151
        %v1153 = vsub.f32 %v1144, %v1149
        %v1154 = vsub.f32 %v1145, %v1152
        %v1155 = vmul.f32 %v1153, 1.442695
        %v1156 = vpow.pop %v1155
        %v1157 = vmul.f32 %v1154, 1.442695
        %v1158 = vpow.pop %v1157
        %v1159 = vsel %vm1146, %v1156, 0.0
        %1160 = vadd.xlane.f32.xlu0 %v1159
        %v1161 = vpop.xlane.xlu0 %1160
        %v1162 = vsel %vm1146, %v1158, 0.0
        %1163 = vadd.xlane.f32.xlu0 %v1162
        %v1164 = vpop.xlane.xlu0 %1163
        %v1165 = vrcp.pop %v1161
        %v1166 = vmul.f32 %v1156, %v1165
        %v1167 = vrcp.pop %v1164
        %v1168 = vmul.f32 %v1158, %v1167
        %v1169 = vpack.c.bf16 %v1168, %v1166
        %v1170 = vpack.c.bf16 %v1089, %v1086
        %v1172 = vsel %vm1146, %v1169, 0
        %1174 = vmatprep.subr.bf16.mxu0 0
        %1175 = vmatpush1.bf16.msra.mxu0 0
        %1176 = vmatprep.subr.bf16.mxu0 0
        %1177 = vmatpush1.bf16.msra.mxu0 0
        %1178 = vmatprep.subr.bf16.mxu0 0
        %1179 = vmatpush1.bf16.msra.mxu0 0
        %1180 = vmatprep.subr.bf16.mxu0 0
        %1181 = vmatpush1.bf16.msra.mxu0 0
        %1182 = vmatprep.subr.bf16.mxu0 0
        %1183 = vmatpush1.bf16.msra.mxu0 0
        %1184 = vmatprep.subr.bf16.mxu0 0
        %1185 = vmatpush1.bf16.msra.mxu0 0
        %1186 = vmatprep.subr.bf16.mxu0 0
        %1187 = vmatpush1.bf16.msra.mxu0 0
        %1188 = vmatprep.subr.bf16.mxu0 0
        %1189 = vmatpush1.bf16.msra.mxu0 %v1170
        %1190 = vmatprep.subr.bf16.mxu0 0
        %1191 = vmatpush2.bf16.msra.mxu0 0
        %1192 = vmatprep.subr.bf16.mxu0 0
        %1193 = vmatpush2.bf16.msra.mxu0 0
        %1194 = vmatprep.subr.bf16.mxu0 0
        %1195 = vmatpush2.bf16.msra.mxu0 0
        %1196 = vmatprep.subr.bf16.mxu0 0
        %1197 = vmatpush2.bf16.msra.mxu0 0
        %1198 = vmatprep.subr.bf16.mxu0 0
        %1199 = vmatpush2.bf16.msra.mxu0 0
        %1200 = vmatprep.subr.bf16.mxu0 0
        %1201 = vmatpush2.bf16.msra.mxu0 0
        %1202 = vmatprep.subr.bf16.mxu0 0
        %1203 = vmatpush2.bf16.msra.mxu0 0
        %1204 = vmatprep.subr.bf16.mxu0 0
        %1205 = vmatpush2.bf16.msra.mxu0 0
        %1206 = vmatprep.mubr.bf16.mxu0 0
        %1207 = vmatmul.mubr.bf16.gmra.mxu0 %v1172
        %v1208 = vpop.f32.mrf.mxu0
        %v1209 = vadd.f32 0.0, %v1208
        %v1210 = vpop.f32.mrf.mxu0
        %v1211 = vpop.f32.mrf.mxu0
        %v1212 = vadd.f32 0.0, %v1211
        %v1213 = vpop.f32.mrf.mxu0
        %1214 = vdwg.mxu0
        %1215 = vst [vmem:[%s259] sm:$0xff] %v1209
        %1216 = vst [vmem:[%s259 + $0x8] sm:$0xff] %v1212
        %s1217 = sand.u32 %s120, 1
        %s1218 = scalar_lea.sflag [#allocation4], %s1217
        %s1219 = sand.u32 %s120, 1
        %s1220 = smul.addr %s1219, 16
        %s1221 = scalar_lea.vmem [#allocation10], %s1220
        // Predicated region
        $region53: #{tpu_custom_call.1} parent=35 // pred_check
          %p1222 = pneg %p130
        $region54: #{tpu_custom_call.1} parent=35 // pred_check_branch
          %1224 = sbr.rel (%p1222) target = $region56
        $region55: #{tpu_custom_call.1} parent=35 // pred_region
          %s1226 = ssub.s32 256, 256
          %1227 = vsyncadd %s1218, %s1226
          %s1228 = smul.addr %s23, 2
          %s1229 = smul.addr %s1228, 128
          %s1230 = scalar_lea.hbm %s4, %s1229
          %s1231 = sshll.u32 %s1221, 4
          %s1232 = int_to_ptr.vmem [resolvable:$true] %s1231
          %1237 = dma.vmem_to_hbm [thread:$0]  %s1232, 256, %s1230, %s1218, 128, 128, 8
        $region56: #{tpu_custom_call.1} parent=35 // pred_fallthru
          _
      $region36: #{tpu_custom_call.1} parent=5 // pred_fallthru
        _
      %p1238 = scmp.le.s32.totalorder 2, %s18
      // Predicated region
      $region57: #{tpu_custom_call.1} parent=5 // pred_check
        %p1239 = pneg %p1238
      $region58: #{tpu_custom_call.1} parent=5 // pred_check_branch
        %1241 = sbr.rel (%p1239) target = $region60
      $region59: #{tpu_custom_call.1} parent=5 // pred_region
        %s1242 = ssub.s32 %s18, 2
        // Predicated region
        $region61: #{tpu_custom_call.1} parent=59 // pred_check
          %p1243 = pneg %p136
        $region62: #{tpu_custom_call.1} parent=59 // pred_check_branch
          %1245 = sbr.rel (%p1243) target = $region64
        $region63: #{tpu_custom_call.1} parent=59 // pred_region
          %s1246 = sand.u32 %s121, 1
          %s1247 = scalar_lea.sflag [#allocation4], %s1246
          %s1248 = sand.u32 %s121, 1
          %s1249 = smul.addr %s1248, 16
          %s1250 = scalar_lea.vmem [#allocation10], %s1249
          %1251 = dma.done %s1247, 256
        $region64: #{tpu_custom_call.1} parent=59 // pred_fallthru
          _
      $region60: #{tpu_custom_call.1} parent=5 // pred_fallthru
        _
    $region6: #{tpu_custom_call.1} parent=1 // loop_footer
      %s22 = sadd.s32 1, %s18
    $region7: #{tpu_custom_call.1} parent=1 // loop_footer_branch
      %17 = sbr.rel target = $region3
    $region8: #{tpu_custom_call.1} parent=1 // loop_exit
      _
    %1252 = vsyncpa [#allocation3], 1
    %s1253 = scalar_lea.sflag [#allocation3], 1
    %1254 = vsyncpa %s1253, 1
    %1255 = vsyncpa [#allocation6], 1
    %1256 = vsyncpa [#allocation9], 1
    %1257 = vsyncpa [#allocation4], 1
    %s1258 = scalar_lea.sflag [#allocation4], 1
    %1259 = vsyncpa %s1258, 1

</llo_original>
